<compile_context>
chip_gen: v5e
topology: v5e:2x2
jax: 0.10.0
libtpu: 0.0.40
codegen_flags: <defaults>
</compile_context>

<pallas_src>
import functools

import jax
import jax.numpy as jnp
from jax.experimental import pallas as pl
from jax.experimental.pallas import tpu as pltpu

_EPS = 1e-5  # torch.nn.functional.instance_norm default eps


# ----------------------------------------------------------------------------
# Path 1: full spatial extent per block -> single fused kernel.
# ----------------------------------------------------------------------------
def _instnorm_relu_kernel(x_ref, o_ref):
    # x_ref: (tile_rows, H*W) in VMEM. One row == one instance, so the
    # reduction stays intra-block and lane-dense.
    x = x_ref[...].astype(jnp.float32)
    inv_hw = jnp.float32(1.0 / x.shape[-1])
    # Two-pass variance: matches the reference math and avoids E[x^2]-E[x]^2
    # cancellation. The extra VPU/XLU pass over the resident tile hides under
    # the DMA (kernel is HBM-bandwidth bound).
    mean = jnp.sum(x, axis=-1, keepdims=True) * inv_hw
    xc = x - mean
    var = jnp.sum(xc * xc, axis=-1, keepdims=True) * inv_hw
    y = xc * jax.lax.rsqrt(var + jnp.float32(_EPS))
    o_ref[...] = jnp.maximum(y, 0.0).astype(o_ref.dtype)


# ----------------------------------------------------------------------------
# Path 2 (large H*W fallback): stats pass + normalize pass.
# ----------------------------------------------------------------------------
def _stats_kernel(x_ref, mean_ref, rstd_ref, s1_ref, s2_ref, *, hw, tile_hw):
    j = pl.program_id(1)

    @pl.when(j == 0)
    def _():
        s1_ref[...] = jnp.zeros_like(s1_ref)
        s2_ref[...] = jnp.zeros_like(s2_ref)

    x = x_ref[...].astype(jnp.float32)
    # Mask columns past the true spatial extent (partial last HW tile reads
    # unspecified out-of-bounds data).
    col = j * tile_hw + jax.lax.broadcasted_iota(jnp.int32, x.shape, x.ndim - 1)
    x = jnp.where(col < hw, x, 0.0)
    s1_ref[...] += jnp.sum(x, axis=-1, keepdims=True)
    s2_ref[...] += jnp.sum(x * x, axis=-1, keepdims=True)

    @pl.when(j == pl.num_programs(1) - 1)
    def _():
        inv_hw = jnp.float32(1.0 / hw)
        mean = s1_ref[...] * inv_hw
        # One-pass variance with f32 accumulation for the tiled path; clamp
        # fp round-off so rsqrt never sees a negative value.
        var = jnp.maximum(s2_ref[...] * inv_hw - mean * mean, 0.0)
        mean_ref[...] = mean
        rstd_ref[...] = jax.lax.rsqrt(var + jnp.float32(_EPS))


def _normalize_kernel(x_ref, mean_ref, rstd_ref, o_ref):
    x = x_ref[...].astype(jnp.float32)
    y = (x - mean_ref[...]) * rstd_ref[...]
    o_ref[...] = jnp.maximum(y, 0.0).astype(o_ref.dtype)


# ----------------------------------------------------------------------------
# Wrapper / tiling heuristics.
# ----------------------------------------------------------------------------
def _target_block_bytes(itemsize: int) -> int:
    try:
        kind = jax.devices()[0].device_kind.lower()
    except Exception:  # pragma: no cover
        kind = ""
    # v6e / v7x: 32 MiB scoped-VMEM default -> ~4 MiB blocks (double-buffered
    # in+out = 16 MiB, leaving headroom for the f32 temporaries).
    # v5e / older / unknown: 16 MiB scoped default -> ~2 MiB blocks.
    base = 4 * 1024 * 1024 if ("v6" in kind or "v7" in kind or "7x" in kind) else 2 * 1024 * 1024
    # Sub-4-byte inputs get upcast to f32 inside the kernel (plus a centered
    # temporary), so effective VMEM pressure is ~2-3x the block bytes.
    if itemsize < 4:
        base //= 2
    return base


def _round_up(x: int, m: int) -> int:
    return ((x + m - 1) // m) * m


def _fits_path(x2d, rows, hw, itemsize, block_bytes, sub):
    bytes_per_row = hw * itemsize
    tile_rows = max(sub, (block_bytes // bytes_per_row) // sub * sub)
    if tile_rows >= rows:
        if rows >= 2 * sub:
            # Keep >= 2 grid steps so both v7x TensorCores get work
            # (harmless on single-TC v5e/v6e).
            tile_rows = _round_up((rows + 1) // 2, sub)
        else:
            tile_rows = rows
    grid = (pl.cdiv(rows, tile_rows),)

    cost = pl.CostEstimate(
        flops=8 * rows * hw,
        transcendentals=rows,
        bytes_accessed=2 * rows * hw * itemsize,
    )
    return pl.pallas_call(
        _instnorm_relu_kernel,
        out_shape=jax.ShapeDtypeStruct((rows, hw), x2d.dtype),
        grid=grid,
        in_specs=[pl.BlockSpec((tile_rows, hw), lambda i: (i, 0))],
        out_specs=pl.BlockSpec((tile_rows, hw), lambda i: (i, 0)),
        compiler_params=pltpu.CompilerParams(dimension_semantics=("parallel",)),
        cost_estimate=cost,
    )(x2d)


def _tiled_hw_path(x2d, rows, hw, itemsize, block_bytes, sub):
    tile_rows = rows if rows < sub else sub
    tile_hw = max(128, (block_bytes // (tile_rows * itemsize)) // 128 * 128)
    tile_hw = min(tile_hw, _round_up(hw, 128))
    grid_rows = pl.cdiv(rows, tile_rows)
    grid_hw = pl.cdiv(hw, tile_hw)

    stats_cost = pl.CostEstimate(
        flops=4 * rows * hw,
        transcendentals=rows,
        bytes_accessed=rows * hw * itemsize + 8 * rows,
    )
    mean, rstd = pl.pallas_call(
        functools.partial(_stats_kernel, hw=hw, tile_hw=tile_hw),
        out_shape=(
            jax.ShapeDtypeStruct((rows, 1), jnp.float32),
            jax.ShapeDtypeStruct((rows, 1), jnp.float32),
        ),
        grid=(grid_rows, grid_hw),
        in_specs=[pl.BlockSpec((tile_rows, tile_hw), lambda i, j: (i, j))],
        out_specs=(
            pl.BlockSpec((tile_rows, 1), lambda i, j: (i, 0)),
            pl.BlockSpec((tile_rows, 1), lambda i, j: (i, 0)),
        ),
        scratch_shapes=[
            pltpu.VMEM((tile_rows, 1), jnp.float32),
            pltpu.VMEM((tile_rows, 1), jnp.float32),
        ],
        compiler_params=pltpu.CompilerParams(
            dimension_semantics=("parallel", "arbitrary")
        ),
        cost_estimate=stats_cost,
    )(x2d)

    norm_cost = pl.CostEstimate(
        flops=3 * rows * hw,
        transcendentals=0,
        bytes_accessed=2 * rows * hw * itemsize + 8 * rows,
    )
    out2d = pl.pallas_call(
        _normalize_kernel,
        out_shape=jax.ShapeDtypeStruct((rows, hw), x2d.dtype),
        grid=(grid_rows, grid_hw),
        in_specs=[
            pl.BlockSpec((tile_rows, tile_hw), lambda i, j: (i, j)),
            pl.BlockSpec((tile_rows, 1), lambda i, j: (i, 0)),
            pl.BlockSpec((tile_rows, 1), lambda i, j: (i, 0)),
        ],
        out_specs=pl.BlockSpec((tile_rows, tile_hw), lambda i, j: (i, j)),
        compiler_params=pltpu.CompilerParams(
            dimension_semantics=("parallel", "parallel")
        ),
        cost_estimate=norm_cost,
    )(x2d, mean, rstd)
    return out2d


def model_forward(v1: jax.Array, *, max_block_bytes: int | None = None) -> jax.Array:
    """ReLU(instance_norm(cat(split(v1, [1,1,1], 1), 1))) for v1 (N, 3, H, W).

    split+cat along dim=1 is the identity, so v1 feeds the kernel directly
    (no extra HBM round trip).
    """
    n, c, h, w = v1.shape
    assert c == 3, "reference module splits dim=1 into [1, 1, 1]"

    rows = n * c
    hw = h * w
    x2d = v1.reshape(rows, hw)  # pure reshape, no data movement

    itemsize = jnp.dtype(v1.dtype).itemsize
    sub = {4: 8, 2: 16, 1: 32}.get(itemsize, 8)  # sublane packing
    block_bytes = max_block_bytes if max_block_bytes is not None else _target_block_bytes(itemsize)

    # If even the minimum legal row tile (sub rows x full H*W) exceeds the
    # block budget, tile the spatial axis instead (prevents VMEM OOM for large
    # spatial sizes, which would break v7x's 64 MiB VMEM first).
    if sub * hw * itemsize > block_bytes:
        out2d = _tiled_hw_path(x2d, rows, hw, itemsize, block_bytes, sub)
    else:
        out2d = _fits_path(x2d, rows, hw, itemsize, block_bytes, sub)
    return out2d.reshape(n, c, h, w)


def _reference(v1: jax.Array) -> jax.Array:
    x = v1.astype(jnp.float32)
    mean = jnp.mean(x, axis=(2, 3), keepdims=True)
    var = jnp.mean((x - mean) ** 2, axis=(2, 3), keepdims=True)
    y = (x - mean) / jnp.sqrt(var + _EPS)
    return jnp.maximum(y, 0.0).astype(v1.dtype)


if __name__ == "__main__":
    key = jax.random.PRNGKey(0)
    # Small shape consistent with the module: batch=2, channels=3, spatial=16.
    v1 = jax.random.normal(key, (2, 3, 16, 16), dtype=jnp.float32)

    out = model_forward(v1)
    jax.block_until_ready(out)
    ref = _reference(v1)
    assert out.shape == (2, 3, 16, 16)
    assert jnp.allclose(out, ref, atol=1e-5, rtol=1e-5)

    # Also exercise the tiled-HW fallback path (forced tiny block budget) so
    # the large-spatial code path is validated, still at a small shape; the
    # non-multiple-of-128 spatial size exercises the partial-tile masking.
    v2 = jax.random.normal(jax.random.PRNGKey(1), (2, 3, 16, 12), dtype=jnp.float32) + 2.0
    out2 = model_forward(v2, max_block_bytes=4096)
    jax.block_until_ready(out2)
    ref2 = _reference(v2)
    assert out2.shape == (2, 3, 16, 12)
    assert jnp.allclose(out2, ref2, atol=1e-4, rtol=1e-4)

    print("KERNEL_OK")
</pallas_src>

<mosaic_0001>
module attributes {stable_mosaic.version = 11 : i64} {
  func.func @_instnorm_relu_kernel(%arg0: i32, %arg1: memref<6x256xf32, #tpu.memory_space<vmem>>, %arg2: memref<6x256xf32, #tpu.memory_space<vmem>>) attributes {dimension_semantics = [#tpu.dimension_semantics<parallel>], iteration_bounds = array<i64: 1>, scalar_prefetch = 0 : i64, scratch_operands = 0 : i64, tpu.core_type = #tpu.core_type<tc>, window_params = [{transform_indices = @transform_0, window_bounds = array<i64: 6, 256>}, {transform_indices = @transform_1, window_bounds = array<i64: 6, 256>}]} {
    %c0 = arith.constant 0 : index
    %c0_0 = arith.constant 0 : index
    %0 = vector.load %arg1[%c0, %c0_0] : memref<6x256xf32, #tpu.memory_space<vmem>>, vector<6x256xf32>
    %cst = arith.constant dense<0.000000e+00> : vector<6xf32>
    %1 = vector.multi_reduction <add>, %0, %cst [1] : vector<6x256xf32> to vector<6xf32>
    %2 = vector.shape_cast %1 : vector<6xf32> to vector<6x1xf32>
    %cst_1 = arith.constant 3.906250e-03 : f32
    %3 = vector.broadcast %cst_1 : f32 to vector<6x1xf32>
    %4 = arith.mulf %2, %3 : vector<6x1xf32>
    %5 = vector.broadcast %4 : vector<6x1xf32> to vector<6x256xf32>
    %6 = arith.subf %0, %5 : vector<6x256xf32>
    %7 = arith.mulf %6, %6 : vector<6x256xf32>
    %cst_2 = arith.constant dense<0.000000e+00> : vector<6xf32>
    %8 = vector.multi_reduction <add>, %7, %cst_2 [1] : vector<6x256xf32> to vector<6xf32>
    %9 = vector.shape_cast %8 : vector<6xf32> to vector<6x1xf32>
    %cst_3 = arith.constant 3.906250e-03 : f32
    %10 = vector.broadcast %cst_3 : f32 to vector<6x1xf32>
    %11 = arith.mulf %9, %10 : vector<6x1xf32>
    %cst_4 = arith.constant 9.99999974E-6 : f32
    %12 = vector.broadcast %cst_4 : f32 to vector<6x1xf32>
    %13 = arith.addf %11, %12 : vector<6x1xf32>
    %14 = math.rsqrt %13 : vector<6x1xf32>
    %15 = vector.broadcast %14 : vector<6x1xf32> to vector<6x256xf32>
    %16 = arith.mulf %6, %15 : vector<6x256xf32>
    %cst_5 = arith.constant 0.000000e+00 : f32
    %17 = vector.broadcast %cst_5 : f32 to vector<6x256xf32>
    %18 = arith.maximumf %16, %17 : vector<6x256xf32>
    %c0_6 = arith.constant 0 : index
    %c0_7 = arith.constant 0 : index
    %19 = vector.load %arg2[%c0_6, %c0_7] : memref<6x256xf32, #tpu.memory_space<vmem>>, vector<6x256xf32>
    tpu.vector_store %arg2[%c0_6, %c0_7], %18 {strides = array<i32>} : memref<6x256xf32, #tpu.memory_space<vmem>>, vector<6x256xf32>,
    return
  }
  func.func @transform_0(%arg0: i32) -> (i32, i32) {
    %c0_i32 = arith.constant 0 : i32
    %c0_i32_0 = arith.constant 0 : i32
    return %arg0, %c0_i32 : i32, i32
  }
  func.func @transform_1(%arg0: i32) -> (i32, i32) {
    %c0_i32 = arith.constant 0 : i32
    %c0_i32_0 = arith.constant 0 : i32
    return %arg0, %c0_i32 : i32, i32
  }
}

</mosaic_0001>

<llo_original>
// kernel: tpu_custom_call.1
$region0: #{tpu_custom_call.1}
  #allocation0 [shape = 'u32[]', space=smem, size = 0x4, offset = 0x4, fixed_abs, tag = 'smem constant byte address 0x4 - core index']
  #allocation1 [shape = 'u32[72,128]{1,0:T(1,128)}', space=vmem, size = 0x9000, scoped, tag = 'internal scratch']
  %s0 = inlined_call_operand.hbm [shape: f32[6,256], index: 0, kind: input, shape index: {}]
  %s1 = inlined_call_operand.hbm [shape: f32[6,256], index: 1, kind: output, shape index: {}]
  %s2 = sld [smem:[#allocation0]]
  $region18: #{tpu_custom_call.1} parent=0
    _
  %s4 = ssub.s32 1, %s2
  %s5 = scalar_select 0, %s4, %s2
  $region1: #{tpu_custom_call.1} parent=0
    #allocation2 [shape = 'u8[8192]{0}', space=vmem, size = 0x2000, scoped, tag = 'input window, operand 0, single buffered']
    #allocation3 [shape = 's32[1]{0}', space=sflag, size = 0x4, scoped, tag = 'scoped memory for tpu_custom_call.1']
    #allocation4 [shape = 's32[1]{0}', space=sflag, size = 0x4, scoped, tag = 'scoped memory for tpu_custom_call.1']
    #allocation5 [shape = 'u8[8192]{0}', space=vmem, size = 0x2000, scoped, tag = 'output window, operand 0, single buffered']
    %6 = vsyncpa [#allocation3], 0
    %7 = vsyncpa [#allocation4], 0
    // Predicated region
    $region2: #{tpu_custom_call.1} parent=1 // pred_check
      _
    $region3: #{tpu_custom_call.1} parent=1 // pred_check_branch
      %9 = sbr.rel (0) target = $region5
    $region4: #{tpu_custom_call.1} parent=1 // pred_region
      %11 = vsyncadd [#allocation3], 0
      %s13 = sshll.u32 %s0, 4
      %s14 = int_to_ptr.hbm [resolvable:$true] %s13
      %s15 = sshll.u32 [#allocation2], 4
      %s16 = int_to_ptr.vmem [resolvable:$true] %s15
      %18 = dma.hbm_to_vmem [thread:$0]  %s14, 256, %s16, [#allocation3]
    $region5: #{tpu_custom_call.1} parent=1 // pred_fallthru
      _
    // Predicated region
    $region6: #{tpu_custom_call.1} parent=1 // pred_check
      _
    $region7: #{tpu_custom_call.1} parent=1 // pred_check_branch
      %20 = sbr.rel (0) target = $region9
    $region8: #{tpu_custom_call.1} parent=1 // pred_region
      %22 = dma.done [#allocation3], 256
    $region9: #{tpu_custom_call.1} parent=1 // pred_fallthru
      _
    %v23 = vld [vmem:[#allocation2] sm:$0x3f]
    %v24 = vld [vmem:[#allocation2 + $0x8] sm:$0x3f]
    %vm25 = vcmask 1045504
    %v26 = vsel %vm25, %v23, 0.0
    %v27 = vsel %vm25, %v24, 0.0
    %v28 = vadd.f32 %v26, %v27
    %29 = vadd.xlane.f32.xlu0 %v28
    %v30 = vpop.xlane.xlu0 %29
    %v31 = vmul.f32 %v30, 0.00390625
    %v32 = vsub.f32 %v23, %v31
    %v33 = vsub.f32 %v24, %v31
    %v34 = vmul.f32 %v32, %v32
    %v35 = vmul.f32 %v33, %v33
    %v36 = vsel %vm25, %v34, 0.0
    %v37 = vsel %vm25, %v35, 0.0
    %v38 = vadd.f32 %v36, %v37
    %39 = vadd.xlane.f32.xlu0 %v38
    %v40 = vpop.xlane.xlu0 %39
    %v41 = vmul.f32 %v40, 0.00390625
    %v42 = vadd.f32 %v41, 1e-05
    %v43 = vrsqrt.pop %v42
    %v44 = vmul.f32 %v43, %v42
    %v45 = vmul.f32 %v44, %v43
    %v46 = vmul.f32 0.5, %v45
    %v47 = vsub.f32 1.5, %v46
    %v48 = vmul.f32 %v43, %v47
    %vm49 = vweird.f32 %v42
    %vm50 = vweird.f32 %v43
    %vm51 = vmor %vm49, %vm50
    %v52 = vsel %vm51, %v43, %v48
    %v53 = vmul.f32 %v32, %v52
    %v54 = vmul.f32 %v33, %v52
    %v55 = vmax.f32 %v53, 0.0
    %v56 = vmax.f32 %v54, 0.0
    %57 = vst [vmem:[#allocation5] sm:$0x3f] %v55
    %58 = vst [vmem:[#allocation5 + $0x8] sm:$0x3f] %v56
    // Predicated region
    $region10: #{tpu_custom_call.1} parent=1 // pred_check
      _
    $region11: #{tpu_custom_call.1} parent=1 // pred_check_branch
      %60 = sbr.rel (0) target = $region13
    $region12: #{tpu_custom_call.1} parent=1 // pred_region
      %62 = vsyncadd [#allocation4], 0
      %s64 = sshll.u32 [#allocation5], 4
      %s65 = int_to_ptr.vmem [resolvable:$true] %s64
      %s66 = sshll.u32 %s1, 4
      %s67 = int_to_ptr.hbm [resolvable:$true] %s66
      %69 = dma.vmem_to_hbm [thread:$0]  %s65, 256, %s67, [#allocation4]
    $region13: #{tpu_custom_call.1} parent=1 // pred_fallthru
      _
    // Predicated region
    $region14: #{tpu_custom_call.1} parent=1 // pred_check
      _
    $region15: #{tpu_custom_call.1} parent=1 // pred_check_branch
      %71 = sbr.rel (0) target = $region17
    $region16: #{tpu_custom_call.1} parent=1 // pred_region
      %73 = dma.done [#allocation4], 256
    $region17: #{tpu_custom_call.1} parent=1 // pred_fallthru
      _
    %74 = vsyncpa [#allocation3], 1
    %75 = vsyncpa [#allocation4], 1

</llo_original>
